<compile_context>
chip_gen: v7x
topology: tpu7x:2x2x1
jax: 0.10.0
libtpu: 0.0.40
codegen_flags: <defaults>
</compile_context>

<pallas_src>
import functools
import numpy as np
import jax
import jax.numpy as jnp
from jax.experimental import pallas as pl
from jax.experimental.pallas import tpu as pltpu


def _rfe_kernel(x_ref, wb_ref, o_ref, *, norm_scale):
    # x_ref : (tb, 1)    input tile
    # wb_ref: (2, Rp)    row 0 = weights.T, row 1 = biases (resident across grid)
    # o_ref : (tb, Rp)   output tile (lane-dense)
    x = x_ref[...]                    # (tb, 1)
    w = wb_ref[0:1, :]                # (1, Rp)
    b = wb_ref[1:2, :]                # (1, Rp)
    # Rank-1 projection as a broadcast mul+add on the VPU (no MXU / MRF latency).
    proj = x * w + b                  # (tb, Rp)
    # cos + normalization fused into the (possibly down-casting) store.
    o_ref[...] = (jnp.cos(proj) * norm_scale).astype(o_ref.dtype)


def _round_up(n, m):
    return ((n + m - 1) // m) * m


def _vmem_budget_and_limit():
    """Generation-aware VMEM budget/limit (v7x: 64 MiB physical vs 128 MiB on v5e/v6e)."""
    try:
        cap = int(pltpu.get_tpu_info().vmem_capacity_bytes)
    except Exception:
        cap = 64 << 20                       # assume the smallest generation (v7x)
    budget = max(8 << 20, min(cap // 4, 32 << 20))   # what the tiler may consume
    limit = max(32 << 20, min(cap // 2, 64 << 20))   # scoped-VMEM limit we request
    return budget, limit


def _choose_block_b(B, Rp, out_itemsize, vmem_budget_bytes, *,
                    target_steps=8, block_b_cap=2048, min_rows=128):
    """Batch tile: ~target_steps grid steps, >=min_rows rows, within VMEM budget."""
    # Per-row VMEM cost, double-buffered:
    #   output rows:  2 * Rp * out_itemsize
    #   x rows:       2 * 128 * 4   ((tb, 1) f32 block is lane-padded to 128 lanes)
    bytes_per_row = 2 * Rp * out_itemsize + 2 * 128 * 4
    vmem_rows = max(8, (vmem_budget_bytes // bytes_per_row) // 8 * 8)
    # ~target_steps steps gives the software pipeline a steady state (and, on
    # v7x, >=4 steps per TensorCore); the min_rows floor keeps each output DMA
    # large enough to stream near the HBM roofline.
    steps_rows = _round_up(pl.cdiv(B, target_steps), 8)
    return min(block_b_cap, vmem_rows, max(min_rows, steps_rows))


def random_feature_embed(x, weights, biases, *, scale=1.0, block_b=None,
                         out_dtype=jnp.float32):
    """Pallas TPU forward of RandomFeatureEmbedder.

    x: (..., 1); weights: (R, 1); biases: (R,). Returns (..., R) in `out_dtype`.

    Fast path: pass ``out_dtype=jnp.bfloat16`` when downstream tolerates it —
    it halves the dominant B*R HBM writeback (math stays f32 inside the kernel,
    the cast is fused into the store).
    """
    R = int(weights.shape[0])
    orig_shape = x.shape
    assert orig_shape[-1] == 1, "input_dim must be 1"

    x2 = x.reshape(-1, 1).astype(jnp.float32)
    B = int(x2.shape[0])
    out_dtype = jnp.dtype(out_dtype)

    # Keep the output lane-dense: pad the feature dim to a multiple of 128 so
    # stores are unmasked full-lane vst's. Normalization uses the true R; the
    # padded columns are sliced off only when R is not already 128-aligned.
    Rp = _round_up(R, 128)
    wT = weights.reshape(R, 1).T.astype(jnp.float32)      # (1, R)
    b2 = biases.reshape(1, R).astype(jnp.float32)         # (1, R)
    wb = jnp.concatenate([wT, b2], axis=0)                # (2, R)
    if Rp != R:
        wb = jnp.pad(wb, ((0, 0), (0, Rp - R)))           # (2, Rp)

    vmem_budget, vmem_limit = _vmem_budget_and_limit()
    if block_b is None:
        block_b = _choose_block_b(B, Rp, out_dtype.itemsize, vmem_budget)
    # Sanitize: block rows must be a multiple of 8 and never exceed the
    # (8-aligned) array extent; a trailing ragged block is fine, an oversized
    # block is not. For tiny B the block equals the full dim (also legal).
    if B >= 8:
        block_b = max(8, min((block_b // 8) * 8, (B // 8) * 8))
    else:
        block_b = B

    norm_scale = float(np.sqrt(2.0 / R) * scale)
    grid = (pl.cdiv(B, block_b),)     # ragged last block handled by Pallas masking
    kernel = functools.partial(_rfe_kernel, norm_scale=norm_scale)

    cost = pl.CostEstimate(
        flops=2 * B * Rp,
        transcendentals=B * Rp,
        bytes_accessed=out_dtype.itemsize * B * Rp + 4 * B + 4 * 2 * Rp,
    )

    out = pl.pallas_call(
        kernel,
        out_shape=jax.ShapeDtypeStruct((B, Rp), out_dtype),
        grid_spec=pltpu.PrefetchScalarGridSpec(
            num_scalar_prefetch=0,
            grid=grid,
            in_specs=[
                pl.BlockSpec((block_b, 1), lambda i: (i, 0)),   # x column tile
                pl.BlockSpec((2, Rp), lambda i: (0, 0)),        # packed weightsT+bias
            ],
            out_specs=pl.BlockSpec((block_b, Rp), lambda i: (i, 0)),
        ),
        compiler_params=pltpu.CompilerParams(
            dimension_semantics=("parallel",),
            vmem_limit_bytes=vmem_limit,
        ),
        cost_estimate=cost,
    )(x2, wb)

    if Rp != R:
        out = out[:, :R]
    return out.reshape(*orig_shape[:-1], R)


if __name__ == "__main__":
    key = jax.random.PRNGKey(0)
    k_x, k_w, k_b, k_x2 = jax.random.split(key, 4)

    num_random_features = 128
    length_scale = 1.0
    scale = 1.0

    # Deterministic synthetic parameters (gaussian kernel variant).
    weights = jax.random.normal(k_w, (num_random_features, 1), jnp.float32) / length_scale
    biases = jax.random.uniform(k_b, (num_random_features,), jnp.float32) * (2.0 * np.pi)

    def reference(xv):
        return jnp.cos(xv @ weights.T + biases) * np.sqrt(2.0 / num_random_features) * scale

    # Small input: batch of scalar features, shape (4, 8, 1) -> output (4, 8, 128).
    x = jax.random.normal(k_x, (4, 8, 1), jnp.float32)
    out = jax.block_until_ready(random_feature_embed(x, weights, biases, scale=scale))
    np.testing.assert_allclose(np.asarray(out), np.asarray(reference(x)),
                               rtol=1e-5, atol=1e-5)

    # Ragged batch (B=21, not a multiple of the block): exercises the
    # no-padding / masked-last-block path.
    x_rag = jax.random.normal(k_x2, (3, 7, 1), jnp.float32)
    out_rag = jax.block_until_ready(random_feature_embed(x_rag, weights, biases, scale=scale))
    np.testing.assert_allclose(np.asarray(out_rag), np.asarray(reference(x_rag)),
                               rtol=1e-5, atol=1e-5)

    # bf16 fast path: halves output HBM traffic on mem-bound v5e/v6e.
    out_bf16 = jax.block_until_ready(
        random_feature_embed(x, weights, biases, scale=scale, out_dtype=jnp.bfloat16))
    np.testing.assert_allclose(np.asarray(out_bf16, dtype=np.float32),
                               np.asarray(reference(x)), rtol=2e-2, atol=2e-2)

    print("KERNEL_OK")
</pallas_src>

<mosaic_0001>
module attributes {stable_mosaic.version = 11 : i64} {
  func.func @_rfe_kernel(%arg0: i32, %arg1: memref<32x1xf32, #tpu.memory_space<vmem>>, %arg2: memref<2x128xf32, #tpu.memory_space<vmem>>, %arg3: memref<32x128xf32, #tpu.memory_space<vmem>>) attributes {dimension_semantics = [#tpu.dimension_semantics<parallel>], iteration_bounds = array<i64: 1>, scalar_prefetch = 0 : i64, scratch_operands = 0 : i64, tpu.core_type = #tpu.core_type<tc>, window_params = [{transform_indices = @transform_0, window_bounds = array<i64: 32, 1>}, {pipeline_mode = #tpu.pipeline_mode<synchronous>, transform_indices = @transform_1, window_bounds = array<i64: 2, 128>}, {transform_indices = @transform_2, window_bounds = array<i64: 32, 128>}]} {
    %c0 = arith.constant 0 : index
    %c0_0 = arith.constant 0 : index
    %0 = vector.load %arg1[%c0, %c0_0] : memref<32x1xf32, #tpu.memory_space<vmem>>, vector<32x1xf32>
    %c0_1 = arith.constant 0 : index
    %c0_2 = arith.constant 0 : index
    %1 = vector.load %arg2[%c0_1, %c0_2] : memref<2x128xf32, #tpu.memory_space<vmem>>, vector<1x128xf32>
    %c1 = arith.constant 1 : index
    %c0_3 = arith.constant 0 : index
    %2 = vector.load %arg2[%c1, %c0_3] : memref<2x128xf32, #tpu.memory_space<vmem>>, vector<1x128xf32>
    %3 = vector.broadcast %0 : vector<32x1xf32> to vector<32x128xf32>
    %4 = vector.broadcast %1 : vector<1x128xf32> to vector<32x128xf32>
    %5 = arith.mulf %3, %4 : vector<32x128xf32>
    %6 = vector.broadcast %2 : vector<1x128xf32> to vector<32x128xf32>
    %7 = arith.addf %5, %6 : vector<32x128xf32>
    %8 = math.cos %7 : vector<32x128xf32>
    %cst = arith.constant 1.250000e-01 : f32
    %9 = vector.broadcast %cst : f32 to vector<32x128xf32>
    %10 = arith.mulf %8, %9 : vector<32x128xf32>
    %c0_4 = arith.constant 0 : index
    %c0_5 = arith.constant 0 : index
    %11 = vector.load %arg3[%c0_4, %c0_5] : memref<32x128xf32, #tpu.memory_space<vmem>>, vector<32x128xf32>
    tpu.vector_store %arg3[%c0_4, %c0_5], %10 {strides = array<i32>} : memref<32x128xf32, #tpu.memory_space<vmem>>, vector<32x128xf32>,
    return
  }
  func.func @transform_0(%arg0: i32) -> (i32, i32) {
    %c0_i32 = arith.constant 0 : i32
    %c0_i32_0 = arith.constant 0 : i32
    return %arg0, %c0_i32 : i32, i32
  }
  func.func @transform_1(%arg0: i32) -> (i32, i32) {
    %c0_i32 = arith.constant 0 : i32
    %c0_i32_0 = arith.constant 0 : i32
    %c0_i32_1 = arith.constant 0 : i32
    return %c0_i32, %c0_i32_0 : i32, i32
  }
  func.func @transform_2(%arg0: i32) -> (i32, i32) {
    %c0_i32 = arith.constant 0 : i32
    %c0_i32_0 = arith.constant 0 : i32
    return %arg0, %c0_i32 : i32, i32
  }
}

</mosaic_0001>

<llo_original>
// kernel: tpu_custom_call.1
$region0: #{tpu_custom_call.1}
  #allocation0 [shape = 'u32[]', space=smem, size = 0x4, offset = 0x4, fixed_abs, tag = 'smem constant byte address 0x4 - core index']
  #allocation1 [shape = 'u32[144,128]{1,0:T(1,128)}', space=vmem, size = 0x12000, scoped, tag = 'internal scratch']
  %s0 = inlined_call_operand.vmem [shape: f32[32,1], index: 0, kind: input, shape index: {}]
  %s1 = inlined_call_operand.vmem [shape: f32[2,128], index: 1, kind: input, shape index: {}]
  %s2 = inlined_call_operand.hbm [shape: f32[32,128], index: 2, kind: output, shape index: {}]
  %s3 = sld [smem:[#allocation0]]
  $region18: #{tpu_custom_call.1} parent=0
    _
  %s5 = ssub.s32 1, %s3
  %s6 = scalar_select 0, %s5, %s3
  $region1: #{tpu_custom_call.1} parent=0
    #allocation2 [shape = 'u8[16384]{0}', space=vmem, size = 0x4000, scoped, tag = 'output window, operand 0, single buffered']
    #allocation3 [shape = 's32[1]{0}', space=sflag, size = 0x4, scoped, tag = 'scoped memory for tpu_custom_call.1']
    %7 = vsyncpa [#allocation3], 0
    // Predicated region
    $region2: #{tpu_custom_call.1} parent=1 // pred_check
      _
    $region3: #{tpu_custom_call.1} parent=1 // pred_check_branch
      %9 = sbr.rel (0) target = $region5
    $region4: #{tpu_custom_call.1} parent=1 // pred_region
      _
    $region5: #{tpu_custom_call.1} parent=1 // pred_fallthru
      _
    // Predicated region
    $region6: #{tpu_custom_call.1} parent=1 // pred_check
      _
    $region7: #{tpu_custom_call.1} parent=1 // pred_check_branch
      %11 = sbr.rel (0) target = $region9
    $region8: #{tpu_custom_call.1} parent=1 // pred_region
      _
    $region9: #{tpu_custom_call.1} parent=1 // pred_fallthru
      _
    %v12 = vld [vmem:[%s0] sm:$0xff]
    %v13 = vld [vmem:[%s0 + $0x8] sm:$0xff]
    %v14 = vld [vmem:[%s0 + $0x10] sm:$0xff]
    %v15 = vld [vmem:[%s0 + $0x18] sm:$0xff]
    %v16 = vld [vmem:[%s1] sm:$0x1]
    %v17 = vld [vmem:[%s1 + $0x1] sm:$0x1]
    %19 = vset.pattern.permute.xlu0 0
    %20 = vperm.xlu0 %19, %v12
    %v21 = vpop.permute.xlu0 %20
    %24 = vset.pattern.permute.xlu0 0
    %25 = vperm.xlu0 %24, %v13
    %v26 = vpop.permute.xlu0 %25
    %29 = vset.pattern.permute.xlu0 0
    %30 = vperm.xlu0 %29, %v14
    %v31 = vpop.permute.xlu0 %30
    %34 = vset.pattern.permute.xlu0 0
    %35 = vperm.xlu0 %34, %v15
    %v36 = vpop.permute.xlu0 %35
    %v38 = vlaneseq
    %v39 = vshrl.u32 %v38, 7
    %v40 = vsub.s32 0, %v39
    %v41 = vrot.slane %v16, %v40
    %v42 = vmul.f32 %v21, %v41
    %v43 = vmul.f32 %v26, %v41
    %v44 = vmul.f32 %v31, %v41
    %v45 = vmul.f32 %v36, %v41
    %v46 = vlaneseq
    %v47 = vshrl.u32 %v46, 7
    %v48 = vsub.s32 0, %v47
    %v49 = vrot.slane %v17, %v48
    %v50 = vadd.f32 %v42, %v49
    %v51 = vadd.f32 %v43, %v49
    %v52 = vadd.f32 %v44, %v49
    %v53 = vadd.f32 %v45, %v49
    %v54 = vand.u32 2147483647, %v50
    %vm55 = vcmp.le.f32.partialorder %v54, 0.7853982
    %vm56 = vcmp.lt.s32.totalorder %v50, 0
    %v57 = vand.u32 %v50, 2139095040
    %v58 = vshrl.u32 %v57, 23
    %v59 = vsub.s32 %v58, 127
    %v60 = vand.u32 2147483647, %v50
    %v61 = vand.u32 %v60, 8388607
    %v62 = vor.u32 %v61, 8388608
    %v63 = vsub.s32 0, %v62
    %v64 = vadd.s32 %v59, 1
    %vm65 = vcmp.gt.s32.totalorder %v64, 0
    %v66 = vsel %vm65, %v64, 0
    %v67 = vshrl.u32 %v66, 5
    %v68 = vand.u32 %v66, 31
    %v69 = vsub.s32 32, %v68
    %v70 = vshrl.u32 683565275, %v69
    %v71 = vshll.u32 683565275, %v68
    %v72 = vshrl.u32 2475754826, %v69
    %v73 = vor.u32 %v71, %v72
    %v74 = vshll.u32 2475754826, %v68
    %v75 = vshrl.u32 2131351028, %v69
    %v76 = vor.u32 %v74, %v75
    %v77 = vshll.u32 2131351028, %v68
    %v78 = vshrl.u32 2102212464, %v69
    %v79 = vor.u32 %v77, %v78
    %v80 = vshll.u32 2102212464, %v68
    %v81 = vshrl.u32 920167782, %v69
    %v82 = vor.u32 %v80, %v81
    %v83 = vshll.u32 920167782, %v68
    %v84 = vshrl.u32 1326507024, %v69
    %v85 = vor.u32 %v83, %v84
    %vm86 = vcmp.lt.s32.totalorder %v67, 1
    %vm87 = vcmp.lt.s32.totalorder %v67, 2
    %vm88 = vcmp.lt.s32.totalorder %v67, 3
    %vm89 = vcmp.lt.s32.totalorder %v67, 4
    %v90 = vsel %vm86, %v70, %v73
    %v91 = vsel %vm89, %v79, 2102212464
    %v92 = vsel %vm88, %v76, %v91
    %v93 = vsel %vm87, %v90, %v92
    %v94 = vsel %vm86, %v73, %v76
    %v95 = vsel %vm89, %v82, 920167782
    %v96 = vsel %vm88, %v79, %v95
    %v97 = vsel %vm87, %v94, %v96
    %v98 = vsel %vm86, %v76, %v79
    %v99 = vsel %vm89, %v85, 1326507024
    %v100 = vsel %vm88, %v82, %v99
    %v101 = vsel %vm87, %v98, %v100
    %v102 = vshll.u32 %v62, 8
    %v103 = vmul.u32.u64.compose %v102, %v101
    %v104 = vextract.low.u32 %v103
    %v105 = vextract.high.u32 %v103
    %v106 = vmul.u32.u64.compose %v102, %v97
    %v107 = vextract.low.u32 %v106
    %v108 = vextract.high.u32 %v106
    %v109 = vmul.u32 %v102, %v93
    %v110 = vadd.s32 %v105, %v107
    %vm111 = vc.u32 %v105, %v107
    %v112 = vadd.s32 %v108, 1
    %v113 = vsel %vm111, %v112, %v108
    %v114 = vadd.s32 %v109, %v113
    %v115 = vadd.s32 %v114, 536870912
    %v116 = vshrl.u32 %v115, 30
    %v117 = vshll.u32 %v116, 30
    %v118 = vsub.s32 %v114, %v117
    %vm119 = vcmp.lt.s32.totalorder %v118, 0
    %v120 = vsub.s32 0, %v118
    %v121 = vsel %vm119, %v120, %v118
    %v122 = vclz %v121
    %v123 = vsub.s32 %v122, 2
    %vm124 = vcmp.gt.s32.totalorder 0, %v123
    %v125 = vsel %vm124, 0, %v123
    %v126 = vsub.s32 32, %v125
    %v127 = vshll.u32 %v118, %v125
    %v128 = vshrl.u32 %v110, %v126
    %v129 = vor.u32 %v127, %v128
    %v130 = vsub.s32 4294967266, %v125
    %v131 = vadd.s32 %v130, 127
    %v132 = vshll.u32 %v131, 23
    %v133 = vor.u32 4788187, %v132
    %v134 = vand.u32 2147483647, %v133
    %v136 = vcvt.s32.f32 %v129
    %v137 = vmul.f32 %v136, %v134
    %v138 = vxor.u32 %v137, 2147483648
    %v139 = vsel %vm56, %v138, %v137
    %v140 = vsub.s32 4, %v116
    %v141 = vsel %vm56, %v140, %v116
    %v142 = vsel %vm55, %v50, %v139
    %v143 = vsel %vm55, 0, %v141
    %v144 = vcosq.f32.pop %v142
    %v145 = vsinq.f32.pop %v142
    %vm146 = vweird.f32 %v50
    %v147 = vand.u32 %v143, 3
    %vm148 = vcmp.lt.s32.totalorder %v147, 2
    %vm149 = vcmp.eq.s32.totalorder %v147, 0
    %v150 = vxor.u32 %v145, 2147483648
    %v151 = vsel %vm149, %v144, %v150
    %vm152 = vcmp.eq.s32.totalorder %v147, 2
    %v153 = vxor.u32 %v144, 2147483648
    %v154 = vsel %vm152, %v153, %v145
    %v155 = vsel %vm148, %v151, %v154
    %v156 = vsel %vm146, nan, %v155
    %v157 = vand.u32 2147483647, %v51
    %vm158 = vcmp.le.f32.partialorder %v157, 0.7853982
    %vm159 = vcmp.lt.s32.totalorder %v51, 0
    %v160 = vand.u32 %v51, 2139095040
    %v161 = vshrl.u32 %v160, 23
    %v162 = vsub.s32 %v161, 127
    %v163 = vand.u32 2147483647, %v51
    %v164 = vand.u32 %v163, 8388607
    %v165 = vor.u32 %v164, 8388608
    %v166 = vsub.s32 0, %v165
    %v167 = vadd.s32 %v162, 1
    %vm168 = vcmp.gt.s32.totalorder %v167, 0
    %v169 = vsel %vm168, %v167, 0
    %v170 = vshrl.u32 %v169, 5
    %v171 = vand.u32 %v169, 31
    %v172 = vsub.s32 32, %v171
    %v173 = vshrl.u32 683565275, %v172
    %v174 = vshll.u32 683565275, %v171
    %v175 = vshrl.u32 2475754826, %v172
    %v176 = vor.u32 %v174, %v175
    %v177 = vshll.u32 2475754826, %v171
    %v178 = vshrl.u32 2131351028, %v172
    %v179 = vor.u32 %v177, %v178
    %v180 = vshll.u32 2131351028, %v171
    %v181 = vshrl.u32 2102212464, %v172
    %v182 = vor.u32 %v180, %v181
    %v183 = vshll.u32 2102212464, %v171
    %v184 = vshrl.u32 920167782, %v172
    %v185 = vor.u32 %v183, %v184
    %v186 = vshll.u32 920167782, %v171
    %v187 = vshrl.u32 1326507024, %v172
    %v188 = vor.u32 %v186, %v187
    %vm189 = vcmp.lt.s32.totalorder %v170, 1
    %vm190 = vcmp.lt.s32.totalorder %v170, 2
    %vm191 = vcmp.lt.s32.totalorder %v170, 3
    %vm192 = vcmp.lt.s32.totalorder %v170, 4
    %v193 = vsel %vm189, %v173, %v176
    %v194 = vsel %vm192, %v182, 2102212464
    %v195 = vsel %vm191, %v179, %v194
    %v196 = vsel %vm190, %v193, %v195
    %v197 = vsel %vm189, %v176, %v179
    %v198 = vsel %vm192, %v185, 920167782
    %v199 = vsel %vm191, %v182, %v198
    %v200 = vsel %vm190, %v197, %v199
    %v201 = vsel %vm189, %v179, %v182
    %v202 = vsel %vm192, %v188, 1326507024
    %v203 = vsel %vm191, %v185, %v202
    %v204 = vsel %vm190, %v201, %v203
    %v205 = vshll.u32 %v165, 8
    %v206 = vmul.u32.u64.compose %v205, %v204
    %v207 = vextract.low.u32 %v206
    %v208 = vextract.high.u32 %v206
    %v209 = vmul.u32.u64.compose %v205, %v200
    %v210 = vextract.low.u32 %v209
    %v211 = vextract.high.u32 %v209
    %v212 = vmul.u32 %v205, %v196
    %v213 = vadd.s32 %v208, %v210
    %vm214 = vc.u32 %v208, %v210
    %v215 = vadd.s32 %v211, 1
    %v216 = vsel %vm214, %v215, %v211
    %v217 = vadd.s32 %v212, %v216
    %v218 = vadd.s32 %v217, 536870912
    %v219 = vshrl.u32 %v218, 30
    %v220 = vshll.u32 %v219, 30
    %v221 = vsub.s32 %v217, %v220
    %vm222 = vcmp.lt.s32.totalorder %v221, 0
    %v223 = vsub.s32 0, %v221
    %v224 = vsel %vm222, %v223, %v221
    %v225 = vclz %v224
    %v226 = vsub.s32 %v225, 2
    %vm227 = vcmp.gt.s32.totalorder 0, %v226
    %v228 = vsel %vm227, 0, %v226
    %v229 = vsub.s32 32, %v228
    %v230 = vshll.u32 %v221, %v228
    %v231 = vshrl.u32 %v213, %v229
    %v232 = vor.u32 %v230, %v231
    %v233 = vsub.s32 4294967266, %v228
    %v234 = vadd.s32 %v233, 127
    %v235 = vshll.u32 %v234, 23
    %v236 = vor.u32 4788187, %v235
    %v237 = vand.u32 2147483647, %v236
    %v239 = vcvt.s32.f32 %v232
    %v240 = vmul.f32 %v239, %v237
    %v241 = vxor.u32 %v240, 2147483648
    %v242 = vsel %vm159, %v241, %v240
    %v243 = vsub.s32 4, %v219
    %v244 = vsel %vm159, %v243, %v219
    %v245 = vsel %vm158, %v51, %v242
    %v246 = vsel %vm158, 0, %v244
    %v247 = vcosq.f32.pop %v245
    %v248 = vsinq.f32.pop %v245
    %vm249 = vweird.f32 %v51
    %v250 = vand.u32 %v246, 3
    %vm251 = vcmp.lt.s32.totalorder %v250, 2
    %vm252 = vcmp.eq.s32.totalorder %v250, 0
    %v253 = vxor.u32 %v248, 2147483648
    %v254 = vsel %vm252, %v247, %v253
    %vm255 = vcmp.eq.s32.totalorder %v250, 2
    %v256 = vxor.u32 %v247, 2147483648
    %v257 = vsel %vm255, %v256, %v248
    %v258 = vsel %vm251, %v254, %v257
    %v259 = vsel %vm249, nan, %v258
    %v260 = vand.u32 2147483647, %v52
    %vm261 = vcmp.le.f32.partialorder %v260, 0.7853982
    %vm262 = vcmp.lt.s32.totalorder %v52, 0
    %v263 = vand.u32 %v52, 2139095040
    %v264 = vshrl.u32 %v263, 23
    %v265 = vsub.s32 %v264, 127
    %v266 = vand.u32 2147483647, %v52
    %v267 = vand.u32 %v266, 8388607
    %v268 = vor.u32 %v267, 8388608
    %v269 = vsub.s32 0, %v268
    %v270 = vadd.s32 %v265, 1
    %vm271 = vcmp.gt.s32.totalorder %v270, 0
    %v272 = vsel %vm271, %v270, 0
    %v273 = vshrl.u32 %v272, 5
    %v274 = vand.u32 %v272, 31
    %v275 = vsub.s32 32, %v274
    %v276 = vshrl.u32 683565275, %v275
    %v277 = vshll.u32 683565275, %v274
    %v278 = vshrl.u32 2475754826, %v275
    %v279 = vor.u32 %v277, %v278
    %v280 = vshll.u32 2475754826, %v274
    %v281 = vshrl.u32 2131351028, %v275
    %v282 = vor.u32 %v280, %v281
    %v283 = vshll.u32 2131351028, %v274
    %v284 = vshrl.u32 2102212464, %v275
    %v285 = vor.u32 %v283, %v284
    %v286 = vshll.u32 2102212464, %v274
    %v287 = vshrl.u32 920167782, %v275
    %v288 = vor.u32 %v286, %v287
    %v289 = vshll.u32 920167782, %v274
    %v290 = vshrl.u32 1326507024, %v275
    %v291 = vor.u32 %v289, %v290
    %vm292 = vcmp.lt.s32.totalorder %v273, 1
    %vm293 = vcmp.lt.s32.totalorder %v273, 2
    %vm294 = vcmp.lt.s32.totalorder %v273, 3
    %vm295 = vcmp.lt.s32.totalorder %v273, 4
    %v296 = vsel %vm292, %v276, %v279
    %v297 = vsel %vm295, %v285, 2102212464
    %v298 = vsel %vm294, %v282, %v297
    %v299 = vsel %vm293, %v296, %v298
    %v300 = vsel %vm292, %v279, %v282
    %v301 = vsel %vm295, %v288, 920167782
    %v302 = vsel %vm294, %v285, %v301
    %v303 = vsel %vm293, %v300, %v302
    %v304 = vsel %vm292, %v282, %v285
    %v305 = vsel %vm295, %v291, 1326507024
    %v306 = vsel %vm294, %v288, %v305
    %v307 = vsel %vm293, %v304, %v306
    %v308 = vshll.u32 %v268, 8
    %v309 = vmul.u32.u64.compose %v308, %v307
    %v310 = vextract.low.u32 %v309
    %v311 = vextract.high.u32 %v309
    %v312 = vmul.u32.u64.compose %v308, %v303
    %v313 = vextract.low.u32 %v312
    %v314 = vextract.high.u32 %v312
    %v315 = vmul.u32 %v308, %v299
    %v316 = vadd.s32 %v311, %v313
    %vm317 = vc.u32 %v311, %v313
    %v318 = vadd.s32 %v314, 1
    %v319 = vsel %vm317, %v318, %v314
    %v320 = vadd.s32 %v315, %v319
    %v321 = vadd.s32 %v320, 536870912
    %v322 = vshrl.u32 %v321, 30
    %v323 = vshll.u32 %v322, 30
    %v324 = vsub.s32 %v320, %v323
    %vm325 = vcmp.lt.s32.totalorder %v324, 0
    %v326 = vsub.s32 0, %v324
    %v327 = vsel %vm325, %v326, %v324
    %v328 = vclz %v327
    %v329 = vsub.s32 %v328, 2
    %vm330 = vcmp.gt.s32.totalorder 0, %v329
    %v331 = vsel %vm330, 0, %v329
    %v332 = vsub.s32 32, %v331
    %v333 = vshll.u32 %v324, %v331
    %v334 = vshrl.u32 %v316, %v332
    %v335 = vor.u32 %v333, %v334
    %v336 = vsub.s32 4294967266, %v331
    %v337 = vadd.s32 %v336, 127
    %v338 = vshll.u32 %v337, 23
    %v339 = vor.u32 4788187, %v338
    %v340 = vand.u32 2147483647, %v339
    %v342 = vcvt.s32.f32 %v335
    %v343 = vmul.f32 %v342, %v340
    %v344 = vxor.u32 %v343, 2147483648
    %v345 = vsel %vm262, %v344, %v343
    %v346 = vsub.s32 4, %v322
    %v347 = vsel %vm262, %v346, %v322
    %v348 = vsel %vm261, %v52, %v345
    %v349 = vsel %vm261, 0, %v347
    %v350 = vcosq.f32.pop %v348
    %v351 = vsinq.f32.pop %v348
    %vm352 = vweird.f32 %v52
    %v353 = vand.u32 %v349, 3
    %vm354 = vcmp.lt.s32.totalorder %v353, 2
    %vm355 = vcmp.eq.s32.totalorder %v353, 0
    %v356 = vxor.u32 %v351, 2147483648
    %v357 = vsel %vm355, %v350, %v356
    %vm358 = vcmp.eq.s32.totalorder %v353, 2
    %v359 = vxor.u32 %v350, 2147483648
    %v360 = vsel %vm358, %v359, %v351
    %v361 = vsel %vm354, %v357, %v360
    %v362 = vsel %vm352, nan, %v361
    %v363 = vand.u32 2147483647, %v53
    %vm364 = vcmp.le.f32.partialorder %v363, 0.7853982
    %vm365 = vcmp.lt.s32.totalorder %v53, 0
    %v366 = vand.u32 %v53, 2139095040
    %v367 = vshrl.u32 %v366, 23
    %v368 = vsub.s32 %v367, 127
    %v369 = vand.u32 2147483647, %v53
    %v370 = vand.u32 %v369, 8388607
    %v371 = vor.u32 %v370, 8388608
    %v372 = vsub.s32 0, %v371
    %v373 = vadd.s32 %v368, 1
    %vm374 = vcmp.gt.s32.totalorder %v373, 0
    %v375 = vsel %vm374, %v373, 0
    %v376 = vshrl.u32 %v375, 5
    %v377 = vand.u32 %v375, 31
    %v378 = vsub.s32 32, %v377
    %v379 = vshrl.u32 683565275, %v378
    %v380 = vshll.u32 683565275, %v377
    %v381 = vshrl.u32 2475754826, %v378
    %v382 = vor.u32 %v380, %v381
    %v383 = vshll.u32 2475754826, %v377
    %v384 = vshrl.u32 2131351028, %v378
    %v385 = vor.u32 %v383, %v384
    %v386 = vshll.u32 2131351028, %v377
    %v387 = vshrl.u32 2102212464, %v378
    %v388 = vor.u32 %v386, %v387
    %v389 = vshll.u32 2102212464, %v377
    %v390 = vshrl.u32 920167782, %v378
    %v391 = vor.u32 %v389, %v390
    %v392 = vshll.u32 920167782, %v377
    %v393 = vshrl.u32 1326507024, %v378
    %v394 = vor.u32 %v392, %v393
    %vm395 = vcmp.lt.s32.totalorder %v376, 1
    %vm396 = vcmp.lt.s32.totalorder %v376, 2
    %vm397 = vcmp.lt.s32.totalorder %v376, 3
    %vm398 = vcmp.lt.s32.totalorder %v376, 4
    %v399 = vsel %vm395, %v379, %v382
    %v400 = vsel %vm398, %v388, 2102212464
    %v401 = vsel %vm397, %v385, %v400
    %v402 = vsel %vm396, %v399, %v401
    %v403 = vsel %vm395, %v382, %v385
    %v404 = vsel %vm398, %v391, 920167782
    %v405 = vsel %vm397, %v388, %v404
    %v406 = vsel %vm396, %v403, %v405
    %v407 = vsel %vm395, %v385, %v388
    %v408 = vsel %vm398, %v394, 1326507024
    %v409 = vsel %vm397, %v391, %v408
    %v410 = vsel %vm396, %v407, %v409
    %v411 = vshll.u32 %v371, 8
    %v412 = vmul.u32.u64.compose %v411, %v410
    %v413 = vextract.low.u32 %v412
    %v414 = vextract.high.u32 %v412
    %v415 = vmul.u32.u64.compose %v411, %v406
    %v416 = vextract.low.u32 %v415
    %v417 = vextract.high.u32 %v415
    %v418 = vmul.u32 %v411, %v402
    %v419 = vadd.s32 %v414, %v416
    %vm420 = vc.u32 %v414, %v416
    %v421 = vadd.s32 %v417, 1
    %v422 = vsel %vm420, %v421, %v417
    %v423 = vadd.s32 %v418, %v422
    %v424 = vadd.s32 %v423, 536870912
    %v425 = vshrl.u32 %v424, 30
    %v426 = vshll.u32 %v425, 30
    %v427 = vsub.s32 %v423, %v426
    %vm428 = vcmp.lt.s32.totalorder %v427, 0
    %v429 = vsub.s32 0, %v427
    %v430 = vsel %vm428, %v429, %v427
    %v431 = vclz %v430
    %v432 = vsub.s32 %v431, 2
    %vm433 = vcmp.gt.s32.totalorder 0, %v432
    %v434 = vsel %vm433, 0, %v432
    %v435 = vsub.s32 32, %v434
    %v436 = vshll.u32 %v427, %v434
    %v437 = vshrl.u32 %v419, %v435
    %v438 = vor.u32 %v436, %v437
    %v439 = vsub.s32 4294967266, %v434
    %v440 = vadd.s32 %v439, 127
    %v441 = vshll.u32 %v440, 23
    %v442 = vor.u32 4788187, %v441
    %v443 = vand.u32 2147483647, %v442
    %v445 = vcvt.s32.f32 %v438
    %v446 = vmul.f32 %v445, %v443
    %v447 = vxor.u32 %v446, 2147483648
    %v448 = vsel %vm365, %v447, %v446
    %v449 = vsub.s32 4, %v425
    %v450 = vsel %vm365, %v449, %v425
    %v451 = vsel %vm364, %v53, %v448
    %v452 = vsel %vm364, 0, %v450
    %v453 = vcosq.f32.pop %v451
    %v454 = vsinq.f32.pop %v451
    %vm455 = vweird.f32 %v53
    %v456 = vand.u32 %v452, 3
    %vm457 = vcmp.lt.s32.totalorder %v456, 2
    %vm458 = vcmp.eq.s32.totalorder %v456, 0
    %v459 = vxor.u32 %v454, 2147483648
    %v460 = vsel %vm458, %v453, %v459
    %vm461 = vcmp.eq.s32.totalorder %v456, 2
    %v462 = vxor.u32 %v453, 2147483648
    %v463 = vsel %vm461, %v462, %v454
    %v464 = vsel %vm457, %v460, %v463
    %v465 = vsel %vm455, nan, %v464
    %v466 = vmul.f32 %v156, 0.125
    %v467 = vmul.f32 %v259, 0.125
    %v468 = vmul.f32 %v362, 0.125
    %v469 = vmul.f32 %v465, 0.125
    %470 = vst [vmem:[#allocation2] sm:$0xff] %v466
    %471 = vst [vmem:[#allocation2 + $0x8] sm:$0xff] %v467
    %472 = vst [vmem:[#allocation2 + $0x10] sm:$0xff] %v468
    %473 = vst [vmem:[#allocation2 + $0x18] sm:$0xff] %v469
    // Predicated region
    $region10: #{tpu_custom_call.1} parent=1 // pred_check
      _
    $region11: #{tpu_custom_call.1} parent=1 // pred_check_branch
      %475 = sbr.rel (0) target = $region13
    $region12: #{tpu_custom_call.1} parent=1 // pred_region
      %s477 = ssub.s32 512, 512
      %478 = vsyncadd [#allocation3], %s477
      %s479 = sshll.u32 [#allocation2], 4
      %s480 = int_to_ptr.vmem [resolvable:$true] %s479
      %485 = dma.vmem_to_hbm [thread:$0]  %s480, 512, %s2, [#allocation3], 128, 128, 8
    $region13: #{tpu_custom_call.1} parent=1 // pred_fallthru
      _
    // Predicated region
    $region14: #{tpu_custom_call.1} parent=1 // pred_check
      _
    $region15: #{tpu_custom_call.1} parent=1 // pred_check_branch
      %487 = sbr.rel (0) target = $region17
    $region16: #{tpu_custom_call.1} parent=1 // pred_region
      %488 = dma.done [#allocation3], 512
    $region17: #{tpu_custom_call.1} parent=1 // pred_fallthru
      _
    %489 = vsyncpa [#allocation3], 1

</llo_original>
